<compile_context>
chip_gen: v6e
topology: v6e:2x2x1
jax: 0.10.0
libtpu: 0.0.40
codegen_flags: <defaults>
</compile_context>

<pallas_src>
import jax
import jax.numpy as jnp
from jax.experimental import pallas as pl
from jax.experimental.pallas import tpu as pltpu


_MAX_REGION_BLOCK = 8192  # regions per grid step (out tile = regions * E * 4 bytes)


def _round_up(x, m):
    return ((x + m - 1) // m) * m


def _choose_region_block(n, batch, group):
    """Pick regions-per-grid-step.

    Large blocks amortize the ~0.35us/step pipeline overhead; blocks are
    multiples of 128*group so the packed output rows are full 128-lane tiles;
    when a block divides N exactly no padding / output slice is needed; with a
    single image we keep >= 2 grid steps so both v7x TensorCores get work.
    """
    quantum = 128 * group
    max_nb = max(quantum, (_MAX_REGION_BLOCK // quantum) * quantum)

    # Prefer the largest block that divides N exactly (no pad, no output slice)
    # and still leaves >= 2 grid steps when there is only one image.
    best = None
    for mult in range(1, max_nb // quantum + 1):
        nb = mult * quantum
        if n % nb == 0 and (batch > 1 or n // nb >= 2):
            best = nb
    if best is not None:
        return best

    # Padding unavoidable (or N tiny): take the largest block, then split once
    # if a single image would otherwise occupy a single grid step.
    nb = min(_round_up(n, quantum), max_nb)
    if batch == 1 and n <= nb and nb > quantum:
        nb = _round_up(nb // 2, quantum)
    return nb


def position_encoder_kernel(boxes_ref, w_ref, b_ref, out_ref, stage_ref):
    # boxes_ref : [1, 4, g, nbq]  coords (x1,y1,x2,y2); region = base + g*lane + q
    # w_ref     : [1, E, 6]       per-image weight with 1/W, 1/H, 1/(W*H) folded in
    # b_ref     : [E, 1]          bias as a column
    # out_ref   : [1, nbq, g*E]   g regions packed per 128-lane output row
    # stage_ref : [g*E, nbq]      VMEM staging for the packed accumulator
    g = boxes_ref.shape[2]
    nbq = boxes_ref.shape[3]
    emb = w_ref.shape[1]

    wt = w_ref[0]                                          # [E, 6]
    wcols = [wt[:, p:p + 1] for p in range(6)]             # [E, 1] each, hoisted
    bias_full = jnp.broadcast_to(b_ref[...], (emb, nbq))   # [E, nbq], hoisted once

    for q in range(g):
        x = boxes_ref[0, 0, q:q + 1, :]                    # [1, nbq]
        y = boxes_ref[0, 1, q:q + 1, :]
        w = boxes_ref[0, 2, q:q + 1, :] - x
        h = boxes_ref[0, 3, q:q + 1, :] - y
        # Clamp keeps padded all-zero boxes finite: 0 * (1/eps) == 0, no inf/NaN.
        inv_h = pl.reciprocal(jnp.maximum(h, 1e-30), approx=False)
        feats = (x, y, w, h, w * inv_h, w * h)

        # Unrolled VPU outer product: acc[e, r] = bias[e] + sum_p w[e, p] * feat_p[r]
        acc = bias_full
        for p in range(6):
            acc = acc + wcols[p] * feats[p]                # [E,1] * [1,nbq] -> [E,nbq]
        stage_ref[q * emb:(q + 1) * emb, :] = jax.nn.sigmoid(acc)

    # Single XLU transpose -> fully lane-dense [nbq, g*E] store (g*E == 128 when E|128).
    out_ref[0] = jnp.transpose(stage_ref[...], (1, 0)).astype(out_ref.dtype)


def position_encoder(boxes, imgs_wh, weight, bias):
    """boxes: [B,N,4] (x1,y1,x2,y2); imgs_wh: [B,2] (W,H);
    weight: [E,6] (PyTorch nn.Linear layout); bias: [E]  ->  [B,N,E] float32."""
    B, N, _ = boxes.shape
    E, P = weight.shape
    if P != 6:
        raise ValueError("PositionEncoder uses 6 positional features")

    # Regions packed per 128-lane output row (lane-dense stores when E divides 128).
    if 8 <= E <= 128 and 128 % E == 0:
        g = 128 // E
    else:
        g = 1  # fallback: output lane dim is E itself (masked stores)

    nb = _choose_region_block(N, B, g)
    n_pad = _round_up(N, nb)
    nbq = nb // g

    boxes_f = boxes.astype(jnp.float32)
    if n_pad != N:
        boxes_f = jnp.pad(boxes_f, ((0, 0), (0, n_pad - N), (0, 0)))
    # [B, n_pad, 4] -> [B, 4, g, n_pad//g]: coordinate-major, lane-dense regions.
    boxes_arr = jnp.transpose(boxes_f.reshape(B, n_pad // g, g, 4), (0, 3, 2, 1))

    # Fold the per-image normalisation into the weight columns so the kernel needs
    # no (1,1,2) lane-sparse tile or per-step scalar broadcasts.
    w_img = imgs_wh[:, 0].astype(jnp.float32)
    h_img = imgs_wh[:, 1].astype(jnp.float32)
    inv_w = 1.0 / w_img
    inv_h = 1.0 / h_img
    inv_area = 1.0 / (w_img * h_img)
    ones = jnp.ones_like(inv_w)
    scale = jnp.stack([inv_w, inv_h, inv_w, inv_h, ones, inv_area], axis=-1)  # [B, 6]
    w_scaled = weight.astype(jnp.float32)[None, :, :] * scale[:, None, :]     # [B, E, 6]
    b_col = bias.astype(jnp.float32).reshape(E, 1)                            # [E, 1]

    grid = (B, n_pad // nb)
    out = pl.pallas_call(
        position_encoder_kernel,
        out_shape=jax.ShapeDtypeStruct((B, n_pad // g, g * E), jnp.float32),
        grid=grid,
        in_specs=[
            pl.BlockSpec((1, 4, g, nbq), lambda b, n: (b, 0, 0, n)),
            pl.BlockSpec((1, E, 6), lambda b, n: (b, 0, 0)),
            pl.BlockSpec((E, 1), lambda b, n: (0, 0)),
        ],
        out_specs=pl.BlockSpec((1, nbq, g * E), lambda b, n: (b, n, 0)),
        scratch_shapes=[pltpu.VMEM((g * E, nbq), jnp.float32)],
        compiler_params=pltpu.CompilerParams(
            dimension_semantics=("parallel", "parallel")),
    )(boxes_arr, w_scaled, b_col)

    # Free reshape: [B, n_pad//g, g*E] and [B, n_pad, E] share the same row-major
    # layout, so this introduces no extra HBM pass.
    out = out.reshape(B, n_pad, E)
    if n_pad != N:
        out = out[:, :N, :]
    return out


def _reference(boxes, imgs_wh, weight, bias):
    x = boxes[:, :, 0]
    y = boxes[:, :, 1]
    w = boxes[:, :, 2] - boxes[:, :, 0]
    h = boxes[:, :, 3] - boxes[:, :, 1]
    W = imgs_wh[:, 0:1]
    H = imgs_wh[:, 1:2]
    posi = jnp.stack([x / W, y / H, w / W, h / H, w / h, (w * h) / (W * H)], axis=-1)
    proj = jnp.einsum("bnp,ep->bne", posi, weight,
                      precision=jax.lax.Precision.HIGHEST)
    return jax.nn.sigmoid(proj + bias)


def _make_inputs(key, B, N, E, P=6):
    k1, k2, k3, k4, kw, kb = jax.random.split(key, 6)
    base_wh = jnp.array([[640.0, 480.0], [512.0, 512.0]], dtype=jnp.float32)
    imgs_wh = jnp.tile(base_wh, (max(1, (B + 1) // 2), 1))[:B]
    x1 = jax.random.uniform(k1, (B, N), minval=0.0, maxval=200.0)
    y1 = jax.random.uniform(k2, (B, N), minval=0.0, maxval=200.0)
    bw = jax.random.uniform(k3, (B, N), minval=10.0, maxval=200.0)
    bh = jax.random.uniform(k4, (B, N), minval=10.0, maxval=200.0)
    boxes = jnp.stack([x1, y1, x1 + bw, y1 + bh], axis=-1).astype(jnp.float32)
    bound = 1.0 / (P ** 0.5)
    weight = jax.random.uniform(kw, (E, P), minval=-bound, maxval=bound).astype(jnp.float32)
    bias = jax.random.uniform(kb, (E,), minval=-bound, maxval=bound).astype(jnp.float32)
    return boxes, imgs_wh, weight, bias


if __name__ == "__main__":
    key = jax.random.PRNGKey(0)
    k_small, k_big = jax.random.split(key)

    # Small case (exercises the pad + slice path): B=2, N=8, E=32.
    boxes, imgs_wh, weight, bias = _make_inputs(k_small, B=2, N=8, E=32)
    out = jax.block_until_ready(position_encoder(boxes, imgs_wh, weight, bias))
    ref = _reference(boxes, imgs_wh, weight, bias)
    assert out.shape == (2, 8, 32)
    assert bool(jnp.all(jnp.isfinite(out)))
    assert jnp.allclose(out, ref, atol=1e-5, rtol=1e-5)

    # Larger case (no padding, no output slice: one 1536-region block per image).
    boxes, imgs_wh, weight, bias = _make_inputs(k_big, B=2, N=1536, E=32)
    out = jax.block_until_ready(position_encoder(boxes, imgs_wh, weight, bias))
    ref = _reference(boxes, imgs_wh, weight, bias)
    assert out.shape == (2, 1536, 32)
    assert bool(jnp.all(jnp.isfinite(out)))
    assert jnp.allclose(out, ref, atol=1e-5, rtol=1e-5)

    print("KERNEL_OK")
</pallas_src>

<mosaic_0001>
module attributes {stable_mosaic.version = 11 : i64} {
  func.func @position_encoder_kernel(%arg0: i32, %arg1: i32, %arg2: memref<1x4x4x128xf32, #tpu.memory_space<vmem>>, %arg3: memref<1x32x6xf32, #tpu.memory_space<vmem>>, %arg4: memref<32x1xf32, #tpu.memory_space<vmem>>, %arg5: memref<1x128x128xf32, #tpu.memory_space<vmem>>, %arg6: memref<128x128xf32, #tpu.memory_space<vmem>>) attributes {dimension_semantics = [#tpu.dimension_semantics<parallel>, #tpu.dimension_semantics<parallel>], iteration_bounds = array<i64: 2, 1>, scalar_prefetch = 0 : i64, scratch_operands = 1 : i64, tpu.core_type = #tpu.core_type<tc>, window_params = [{transform_indices = @transform_0, window_bounds = array<i64: 1, 4, 4, 128>}, {transform_indices = @transform_1, window_bounds = array<i64: 1, 32, 6>}, {pipeline_mode = #tpu.pipeline_mode<synchronous>, transform_indices = @transform_2, window_bounds = array<i64: 32, 1>}, {transform_indices = @transform_3, window_bounds = array<i64: 1, 128, 128>}]} {
    %c0 = arith.constant 0 : index
    %c0_0 = arith.constant 0 : index
    %c0_1 = arith.constant 0 : index
    %0 = vector.load %arg3[%c0, %c0_0, %c0_1] : memref<1x32x6xf32, #tpu.memory_space<vmem>>, vector<1x32x6xf32>
    %1 = vector.shape_cast %0 : vector<1x32x6xf32> to vector<32x6xf32>
    %2 = vector.extract_strided_slice %1 {offsets = [0, 0], sizes = [32, 1], strides = [1, 1]} : vector<32x6xf32> to vector<32x1xf32>
    %3 = vector.extract_strided_slice %1 {offsets = [0, 1], sizes = [32, 1], strides = [1, 1]} : vector<32x6xf32> to vector<32x1xf32>
    %4 = vector.extract_strided_slice %1 {offsets = [0, 2], sizes = [32, 1], strides = [1, 1]} : vector<32x6xf32> to vector<32x1xf32>
    %5 = vector.extract_strided_slice %1 {offsets = [0, 3], sizes = [32, 1], strides = [1, 1]} : vector<32x6xf32> to vector<32x1xf32>
    %6 = vector.extract_strided_slice %1 {offsets = [0, 4], sizes = [32, 1], strides = [1, 1]} : vector<32x6xf32> to vector<32x1xf32>
    %7 = vector.extract_strided_slice %1 {offsets = [0, 5], sizes = [32, 1], strides = [1, 1]} : vector<32x6xf32> to vector<32x1xf32>
    %c0_2 = arith.constant 0 : index
    %c0_3 = arith.constant 0 : index
    %8 = vector.load %arg4[%c0_2, %c0_3] : memref<32x1xf32, #tpu.memory_space<vmem>>, vector<32x1xf32>
    %9 = vector.shape_cast %8 : vector<32x1xf32> to vector<32x1xf32>
    %10 = vector.broadcast %9 : vector<32x1xf32> to vector<32x128xf32>
    %c0_4 = arith.constant 0 : index
    %c0_5 = arith.constant 0 : index
    %c0_6 = arith.constant 0 : index
    %c0_7 = arith.constant 0 : index
    %11 = vector.load %arg2[%c0_4, %c0_5, %c0_6, %c0_7] : memref<1x4x4x128xf32, #tpu.memory_space<vmem>>, vector<1x1x1x128xf32>
    %12 = vector.shape_cast %11 : vector<1x1x1x128xf32> to vector<1x128xf32>
    %c0_8 = arith.constant 0 : index
    %c1 = arith.constant 1 : index
    %c0_9 = arith.constant 0 : index
    %c0_10 = arith.constant 0 : index
    %13 = vector.load %arg2[%c0_8, %c1, %c0_9, %c0_10] : memref<1x4x4x128xf32, #tpu.memory_space<vmem>>, vector<1x1x1x128xf32>
    %14 = vector.shape_cast %13 : vector<1x1x1x128xf32> to vector<1x128xf32>
    %c0_11 = arith.constant 0 : index
    %c2 = arith.constant 2 : index
    %c0_12 = arith.constant 0 : index
    %c0_13 = arith.constant 0 : index
    %15 = vector.load %arg2[%c0_11, %c2, %c0_12, %c0_13] : memref<1x4x4x128xf32, #tpu.memory_space<vmem>>, vector<1x1x1x128xf32>
    %16 = vector.shape_cast %15 : vector<1x1x1x128xf32> to vector<1x128xf32>
    %17 = arith.subf %16, %12 : vector<1x128xf32>
    %c0_14 = arith.constant 0 : index
    %c3 = arith.constant 3 : index
    %c0_15 = arith.constant 0 : index
    %c0_16 = arith.constant 0 : index
    %18 = vector.load %arg2[%c0_14, %c3, %c0_15, %c0_16] : memref<1x4x4x128xf32, #tpu.memory_space<vmem>>, vector<1x1x1x128xf32>
    %19 = vector.shape_cast %18 : vector<1x1x1x128xf32> to vector<1x128xf32>
    %20 = arith.subf %19, %14 : vector<1x128xf32>
    %cst = arith.constant 1.000000e-30 : f32
    %21 = vector.broadcast %cst : f32 to vector<1x128xf32>
    %22 = arith.maximumf %20, %21 : vector<1x128xf32>
    %23 = tpu.reciprocal %22 : vector<1x128xf32> -> vector<1x128xf32>
    %24 = arith.mulf %17, %23 : vector<1x128xf32>
    %25 = arith.mulf %17, %20 : vector<1x128xf32>
    %26 = vector.broadcast %2 : vector<32x1xf32> to vector<32x128xf32>
    %27 = vector.broadcast %12 : vector<1x128xf32> to vector<32x128xf32>
    %28 = arith.mulf %26, %27 : vector<32x128xf32>
    %29 = arith.addf %10, %28 : vector<32x128xf32>
    %30 = vector.broadcast %3 : vector<32x1xf32> to vector<32x128xf32>
    %31 = vector.broadcast %14 : vector<1x128xf32> to vector<32x128xf32>
    %32 = arith.mulf %30, %31 : vector<32x128xf32>
    %33 = arith.addf %29, %32 : vector<32x128xf32>
    %34 = vector.broadcast %4 : vector<32x1xf32> to vector<32x128xf32>
    %35 = vector.broadcast %17 : vector<1x128xf32> to vector<32x128xf32>
    %36 = arith.mulf %34, %35 : vector<32x128xf32>
    %37 = arith.addf %33, %36 : vector<32x128xf32>
    %38 = vector.broadcast %5 : vector<32x1xf32> to vector<32x128xf32>
    %39 = vector.broadcast %20 : vector<1x128xf32> to vector<32x128xf32>
    %40 = arith.mulf %38, %39 : vector<32x128xf32>
    %41 = arith.addf %37, %40 : vector<32x128xf32>
    %42 = vector.broadcast %6 : vector<32x1xf32> to vector<32x128xf32>
    %43 = vector.broadcast %24 : vector<1x128xf32> to vector<32x128xf32>
    %44 = arith.mulf %42, %43 : vector<32x128xf32>
    %45 = arith.addf %41, %44 : vector<32x128xf32>
    %46 = vector.broadcast %7 : vector<32x1xf32> to vector<32x128xf32>
    %47 = vector.broadcast %25 : vector<1x128xf32> to vector<32x128xf32>
    %48 = arith.mulf %46, %47 : vector<32x128xf32>
    %49 = arith.addf %45, %48 : vector<32x128xf32>
    %50 = arith.negf %49 : vector<32x128xf32>
    %51 = math.exp %50 : vector<32x128xf32>
    %cst_17 = arith.constant 1.000000e+00 : f32
    %52 = vector.broadcast %cst_17 : f32 to vector<32x128xf32>
    %53 = arith.addf %52, %51 : vector<32x128xf32>
    %54 = arith.divf %52, %53 : vector<32x128xf32>
    %c0_18 = arith.constant 0 : index
    %c0_19 = arith.constant 0 : index
    %55 = vector.load %arg6[%c0_18, %c0_19] : memref<128x128xf32, #tpu.memory_space<vmem>>, vector<32x128xf32>
    tpu.vector_store %arg6[%c0_18, %c0_19], %54 {strides = array<i32>} : memref<128x128xf32, #tpu.memory_space<vmem>>, vector<32x128xf32>,
    %c0_20 = arith.constant 0 : index
    %c0_21 = arith.constant 0 : index
    %c1_22 = arith.constant 1 : index
    %c0_23 = arith.constant 0 : index
    %56 = vector.load %arg2[%c0_20, %c0_21, %c1_22, %c0_23] : memref<1x4x4x128xf32, #tpu.memory_space<vmem>>, vector<1x1x1x128xf32>
    %57 = vector.shape_cast %56 : vector<1x1x1x128xf32> to vector<1x128xf32>
    %c0_24 = arith.constant 0 : index
    %c1_25 = arith.constant 1 : index
    %c1_26 = arith.constant 1 : index
    %c0_27 = arith.constant 0 : index
    %58 = vector.load %arg2[%c0_24, %c1_25, %c1_26, %c0_27] : memref<1x4x4x128xf32, #tpu.memory_space<vmem>>, vector<1x1x1x128xf32>
    %59 = vector.shape_cast %58 : vector<1x1x1x128xf32> to vector<1x128xf32>
    %c0_28 = arith.constant 0 : index
    %c2_29 = arith.constant 2 : index
    %c1_30 = arith.constant 1 : index
    %c0_31 = arith.constant 0 : index
    %60 = vector.load %arg2[%c0_28, %c2_29, %c1_30, %c0_31] : memref<1x4x4x128xf32, #tpu.memory_space<vmem>>, vector<1x1x1x128xf32>
    %61 = vector.shape_cast %60 : vector<1x1x1x128xf32> to vector<1x128xf32>
    %62 = arith.subf %61, %57 : vector<1x128xf32>
    %c0_32 = arith.constant 0 : index
    %c3_33 = arith.constant 3 : index
    %c1_34 = arith.constant 1 : index
    %c0_35 = arith.constant 0 : index
    %63 = vector.load %arg2[%c0_32, %c3_33, %c1_34, %c0_35] : memref<1x4x4x128xf32, #tpu.memory_space<vmem>>, vector<1x1x1x128xf32>
    %64 = vector.shape_cast %63 : vector<1x1x1x128xf32> to vector<1x128xf32>
    %65 = arith.subf %64, %59 : vector<1x128xf32>
    %cst_36 = arith.constant 1.000000e-30 : f32
    %66 = vector.broadcast %cst_36 : f32 to vector<1x128xf32>
    %67 = arith.maximumf %65, %66 : vector<1x128xf32>
    %68 = tpu.reciprocal %67 : vector<1x128xf32> -> vector<1x128xf32>
    %69 = arith.mulf %62, %68 : vector<1x128xf32>
    %70 = arith.mulf %62, %65 : vector<1x128xf32>
    %71 = vector.broadcast %2 : vector<32x1xf32> to vector<32x128xf32>
    %72 = vector.broadcast %57 : vector<1x128xf32> to vector<32x128xf32>
    %73 = arith.mulf %71, %72 : vector<32x128xf32>
    %74 = arith.addf %10, %73 : vector<32x128xf32>
    %75 = vector.broadcast %3 : vector<32x1xf32> to vector<32x128xf32>
    %76 = vector.broadcast %59 : vector<1x128xf32> to vector<32x128xf32>
    %77 = arith.mulf %75, %76 : vector<32x128xf32>
    %78 = arith.addf %74, %77 : vector<32x128xf32>
    %79 = vector.broadcast %4 : vector<32x1xf32> to vector<32x128xf32>
    %80 = vector.broadcast %62 : vector<1x128xf32> to vector<32x128xf32>
    %81 = arith.mulf %79, %80 : vector<32x128xf32>
    %82 = arith.addf %78, %81 : vector<32x128xf32>
    %83 = vector.broadcast %5 : vector<32x1xf32> to vector<32x128xf32>
    %84 = vector.broadcast %65 : vector<1x128xf32> to vector<32x128xf32>
    %85 = arith.mulf %83, %84 : vector<32x128xf32>
    %86 = arith.addf %82, %85 : vector<32x128xf32>
    %87 = vector.broadcast %6 : vector<32x1xf32> to vector<32x128xf32>
    %88 = vector.broadcast %69 : vector<1x128xf32> to vector<32x128xf32>
    %89 = arith.mulf %87, %88 : vector<32x128xf32>
    %90 = arith.addf %86, %89 : vector<32x128xf32>
    %91 = vector.broadcast %7 : vector<32x1xf32> to vector<32x128xf32>
    %92 = vector.broadcast %70 : vector<1x128xf32> to vector<32x128xf32>
    %93 = arith.mulf %91, %92 : vector<32x128xf32>
    %94 = arith.addf %90, %93 : vector<32x128xf32>
    %95 = arith.negf %94 : vector<32x128xf32>
    %96 = math.exp %95 : vector<32x128xf32>
    %cst_37 = arith.constant 1.000000e+00 : f32
    %97 = vector.broadcast %cst_37 : f32 to vector<32x128xf32>
    %98 = arith.addf %97, %96 : vector<32x128xf32>
    %99 = arith.divf %97, %98 : vector<32x128xf32>
    %c32 = arith.constant 32 : index
    %c0_38 = arith.constant 0 : index
    %100 = vector.load %arg6[%c32, %c0_38] : memref<128x128xf32, #tpu.memory_space<vmem>>, vector<32x128xf32>
    tpu.vector_store %arg6[%c32, %c0_38], %99 {strides = array<i32>} : memref<128x128xf32, #tpu.memory_space<vmem>>, vector<32x128xf32>,
    %c0_39 = arith.constant 0 : index
    %c0_40 = arith.constant 0 : index
    %c2_41 = arith.constant 2 : index
    %c0_42 = arith.constant 0 : index
    %101 = vector.load %arg2[%c0_39, %c0_40, %c2_41, %c0_42] : memref<1x4x4x128xf32, #tpu.memory_space<vmem>>, vector<1x1x1x128xf32>
    %102 = vector.shape_cast %101 : vector<1x1x1x128xf32> to vector<1x128xf32>
    %c0_43 = arith.constant 0 : index
    %c1_44 = arith.constant 1 : index
    %c2_45 = arith.constant 2 : index
    %c0_46 = arith.constant 0 : index
    %103 = vector.load %arg2[%c0_43, %c1_44, %c2_45, %c0_46] : memref<1x4x4x128xf32, #tpu.memory_space<vmem>>, vector<1x1x1x128xf32>
    %104 = vector.shape_cast %103 : vector<1x1x1x128xf32> to vector<1x128xf32>
    %c0_47 = arith.constant 0 : index
    %c2_48 = arith.constant 2 : index
    %c2_49 = arith.constant 2 : index
    %c0_50 = arith.constant 0 : index
    %105 = vector.load %arg2[%c0_47, %c2_48, %c2_49, %c0_50] : memref<1x4x4x128xf32, #tpu.memory_space<vmem>>, vector<1x1x1x128xf32>
    %106 = vector.shape_cast %105 : vector<1x1x1x128xf32> to vector<1x128xf32>
    %107 = arith.subf %106, %102 : vector<1x128xf32>
    %c0_51 = arith.constant 0 : index
    %c3_52 = arith.constant 3 : index
    %c2_53 = arith.constant 2 : index
    %c0_54 = arith.constant 0 : index
    %108 = vector.load %arg2[%c0_51, %c3_52, %c2_53, %c0_54] : memref<1x4x4x128xf32, #tpu.memory_space<vmem>>, vector<1x1x1x128xf32>
    %109 = vector.shape_cast %108 : vector<1x1x1x128xf32> to vector<1x128xf32>
    %110 = arith.subf %109, %104 : vector<1x128xf32>
    %cst_55 = arith.constant 1.000000e-30 : f32
    %111 = vector.broadcast %cst_55 : f32 to vector<1x128xf32>
    %112 = arith.maximumf %110, %111 : vector<1x128xf32>
    %113 = tpu.reciprocal %112 : vector<1x128xf32> -> vector<1x128xf32>
    %114 = arith.mulf %107, %113 : vector<1x128xf32>
    %115 = arith.mulf %107, %110 : vector<1x128xf32>
    %116 = vector.broadcast %2 : vector<32x1xf32> to vector<32x128xf32>
    %117 = vector.broadcast %102 : vector<1x128xf32> to vector<32x128xf32>
    %118 = arith.mulf %116, %117 : vector<32x128xf32>
    %119 = arith.addf %10, %118 : vector<32x128xf32>
    %120 = vector.broadcast %3 : vector<32x1xf32> to vector<32x128xf32>
    %121 = vector.broadcast %104 : vector<1x128xf32> to vector<32x128xf32>
    %122 = arith.mulf %120, %121 : vector<32x128xf32>
    %123 = arith.addf %119, %122 : vector<32x128xf32>
    %124 = vector.broadcast %4 : vector<32x1xf32> to vector<32x128xf32>
    %125 = vector.broadcast %107 : vector<1x128xf32> to vector<32x128xf32>
    %126 = arith.mulf %124, %125 : vector<32x128xf32>
    %127 = arith.addf %123, %126 : vector<32x128xf32>
    %128 = vector.broadcast %5 : vector<32x1xf32> to vector<32x128xf32>
    %129 = vector.broadcast %110 : vector<1x128xf32> to vector<32x128xf32>
    %130 = arith.mulf %128, %129 : vector<32x128xf32>
    %131 = arith.addf %127, %130 : vector<32x128xf32>
    %132 = vector.broadcast %6 : vector<32x1xf32> to vector<32x128xf32>
    %133 = vector.broadcast %114 : vector<1x128xf32> to vector<32x128xf32>
    %134 = arith.mulf %132, %133 : vector<32x128xf32>
    %135 = arith.addf %131, %134 : vector<32x128xf32>
    %136 = vector.broadcast %7 : vector<32x1xf32> to vector<32x128xf32>
    %137 = vector.broadcast %115 : vector<1x128xf32> to vector<32x128xf32>
    %138 = arith.mulf %136, %137 : vector<32x128xf32>
    %139 = arith.addf %135, %138 : vector<32x128xf32>
    %140 = arith.negf %139 : vector<32x128xf32>
    %141 = math.exp %140 : vector<32x128xf32>
    %cst_56 = arith.constant 1.000000e+00 : f32
    %142 = vector.broadcast %cst_56 : f32 to vector<32x128xf32>
    %143 = arith.addf %142, %141 : vector<32x128xf32>
    %144 = arith.divf %142, %143 : vector<32x128xf32>
    %c64 = arith.constant 64 : index
    %c0_57 = arith.constant 0 : index
    %145 = vector.load %arg6[%c64, %c0_57] : memref<128x128xf32, #tpu.memory_space<vmem>>, vector<32x128xf32>
    tpu.vector_store %arg6[%c64, %c0_57], %144 {strides = array<i32>} : memref<128x128xf32, #tpu.memory_space<vmem>>, vector<32x128xf32>,
    %c0_58 = arith.constant 0 : index
    %c0_59 = arith.constant 0 : index
    %c3_60 = arith.constant 3 : index
    %c0_61 = arith.constant 0 : index
    %146 = vector.load %arg2[%c0_58, %c0_59, %c3_60, %c0_61] : memref<1x4x4x128xf32, #tpu.memory_space<vmem>>, vector<1x1x1x128xf32>
    %147 = vector.shape_cast %146 : vector<1x1x1x128xf32> to vector<1x128xf32>
    %c0_62 = arith.constant 0 : index
    %c1_63 = arith.constant 1 : index
    %c3_64 = arith.constant 3 : index
    %c0_65 = arith.constant 0 : index
    %148 = vector.load %arg2[%c0_62, %c1_63, %c3_64, %c0_65] : memref<1x4x4x128xf32, #tpu.memory_space<vmem>>, vector<1x1x1x128xf32>
    %149 = vector.shape_cast %148 : vector<1x1x1x128xf32> to vector<1x128xf32>
    %c0_66 = arith.constant 0 : index
    %c2_67 = arith.constant 2 : index
    %c3_68 = arith.constant 3 : index
    %c0_69 = arith.constant 0 : index
    %150 = vector.load %arg2[%c0_66, %c2_67, %c3_68, %c0_69] : memref<1x4x4x128xf32, #tpu.memory_space<vmem>>, vector<1x1x1x128xf32>
    %151 = vector.shape_cast %150 : vector<1x1x1x128xf32> to vector<1x128xf32>
    %152 = arith.subf %151, %147 : vector<1x128xf32>
    %c0_70 = arith.constant 0 : index
    %c3_71 = arith.constant 3 : index
    %c3_72 = arith.constant 3 : index
    %c0_73 = arith.constant 0 : index
    %153 = vector.load %arg2[%c0_70, %c3_71, %c3_72, %c0_73] : memref<1x4x4x128xf32, #tpu.memory_space<vmem>>, vector<1x1x1x128xf32>
    %154 = vector.shape_cast %153 : vector<1x1x1x128xf32> to vector<1x128xf32>
    %155 = arith.subf %154, %149 : vector<1x128xf32>
    %cst_74 = arith.constant 1.000000e-30 : f32
    %156 = vector.broadcast %cst_74 : f32 to vector<1x128xf32>
    %157 = arith.maximumf %155, %156 : vector<1x128xf32>
    %158 = tpu.reciprocal %157 : vector<1x128xf32> -> vector<1x128xf32>
    %159 = arith.mulf %152, %158 : vector<1x128xf32>
    %160 = arith.mulf %152, %155 : vector<1x128xf32>
    %161 = vector.broadcast %2 : vector<32x1xf32> to vector<32x128xf32>
    %162 = vector.broadcast %147 : vector<1x128xf32> to vector<32x128xf32>
    %163 = arith.mulf %161, %162 : vector<32x128xf32>
    %164 = arith.addf %10, %163 : vector<32x128xf32>
    %165 = vector.broadcast %3 : vector<32x1xf32> to vector<32x128xf32>
    %166 = vector.broadcast %149 : vector<1x128xf32> to vector<32x128xf32>
    %167 = arith.mulf %165, %166 : vector<32x128xf32>
    %168 = arith.addf %164, %167 : vector<32x128xf32>
    %169 = vector.broadcast %4 : vector<32x1xf32> to vector<32x128xf32>
    %170 = vector.broadcast %152 : vector<1x128xf32> to vector<32x128xf32>
    %171 = arith.mulf %169, %170 : vector<32x128xf32>
    %172 = arith.addf %168, %171 : vector<32x128xf32>
    %173 = vector.broadcast %5 : vector<32x1xf32> to vector<32x128xf32>
    %174 = vector.broadcast %155 : vector<1x128xf32> to vector<32x128xf32>
    %175 = arith.mulf %173, %174 : vector<32x128xf32>
    %176 = arith.addf %172, %175 : vector<32x128xf32>
    %177 = vector.broadcast %6 : vector<32x1xf32> to vector<32x128xf32>
    %178 = vector.broadcast %159 : vector<1x128xf32> to vector<32x128xf32>
    %179 = arith.mulf %177, %178 : vector<32x128xf32>
    %180 = arith.addf %176, %179 : vector<32x128xf32>
    %181 = vector.broadcast %7 : vector<32x1xf32> to vector<32x128xf32>
    %182 = vector.broadcast %160 : vector<1x128xf32> to vector<32x128xf32>
    %183 = arith.mulf %181, %182 : vector<32x128xf32>
    %184 = arith.addf %180, %183 : vector<32x128xf32>
    %185 = arith.negf %184 : vector<32x128xf32>
    %186 = math.exp %185 : vector<32x128xf32>
    %cst_75 = arith.constant 1.000000e+00 : f32
    %187 = vector.broadcast %cst_75 : f32 to vector<32x128xf32>
    %188 = arith.addf %187, %186 : vector<32x128xf32>
    %189 = arith.divf %187, %188 : vector<32x128xf32>
    %c96 = arith.constant 96 : index
    %c0_76 = arith.constant 0 : index
    %190 = vector.load %arg6[%c96, %c0_76] : memref<128x128xf32, #tpu.memory_space<vmem>>, vector<32x128xf32>
    tpu.vector_store %arg6[%c96, %c0_76], %189 {strides = array<i32>} : memref<128x128xf32, #tpu.memory_space<vmem>>, vector<32x128xf32>,
    %c0_77 = arith.constant 0 : index
    %c0_78 = arith.constant 0 : index
    %191 = vector.load %arg6[%c0_77, %c0_78] : memref<128x128xf32, #tpu.memory_space<vmem>>, vector<128x128xf32>
    %192 = tpu.transpose %191, [1, 0] : vector<128x128xf32> -> vector<128x128xf32>
    %c0_79 = arith.constant 0 : index
    %c0_80 = arith.constant 0 : index
    %c0_81 = arith.constant 0 : index
    %193 = vector.load %arg5[%c0_79, %c0_80, %c0_81] : memref<1x128x128xf32, #tpu.memory_space<vmem>>, vector<1x128x128xf32>
    %194 = vector.shape_cast %193 : vector<1x128x128xf32> to vector<128x128xf32>
    %195 = vector.shape_cast %192 : vector<128x128xf32> to vector<1x128x128xf32>
    tpu.vector_store %arg5[%c0_79, %c0_80, %c0_81], %195 {strides = array<i32>} : memref<1x128x128xf32, #tpu.memory_space<vmem>>, vector<1x128x128xf32>,
    return
  }
  func.func @transform_0(%arg0: i32, %arg1: i32) -> (i32, i32, i32, i32) {
    %c0_i32 = arith.constant 0 : i32
    %c0_i32_0 = arith.constant 0 : i32
    %c0_i32_1 = arith.constant 0 : i32
    return %arg0, %c0_i32, %c0_i32_0, %arg1 : i32, i32, i32, i32
  }
  func.func @transform_1(%arg0: i32, %arg1: i32) -> (i32, i32, i32) {
    %c0_i32 = arith.constant 0 : i32
    %c0_i32_0 = arith.constant 0 : i32
    %c0_i32_1 = arith.constant 0 : i32
    return %arg0, %c0_i32, %c0_i32_0 : i32, i32, i32
  }
  func.func @transform_2(%arg0: i32, %arg1: i32) -> (i32, i32) {
    %c0_i32 = arith.constant 0 : i32
    %c0_i32_0 = arith.constant 0 : i32
    %c0_i32_1 = arith.constant 0 : i32
    return %c0_i32, %c0_i32_0 : i32, i32
  }
  func.func @transform_3(%arg0: i32, %arg1: i32) -> (i32, i32, i32) {
    %c0_i32 = arith.constant 0 : i32
    %c0_i32_0 = arith.constant 0 : i32
    return %arg0, %arg1, %c0_i32 : i32, i32, i32
  }
}

</mosaic_0001>

<llo_original>
// kernel: tpu_custom_call.1
$region0: #{tpu_custom_call.1}
  #allocation0 [shape = 'u32[]', space=smem, size = 0x4, offset = 0x4, fixed_abs, tag = 'smem constant byte address 0x4 - core index']
  #allocation1 [shape = 'u32[144,128]{1,0:T(1,128)}', space=vmem, size = 0x12000, scoped, tag = 'internal scratch']
  #allocation2 [shape = 'f32[128,128]{1,0:T(8,128)}', space=vmem, size = 0x10000, scoped, tag = 'scratch operand']
  %s0 = inlined_call_operand.vmem [shape: f32[2,4,4,128], index: 0, kind: input, shape index: {}]
  %s1 = inlined_call_operand.vmem [shape: f32[2,32,6], index: 1, kind: input, shape index: {}]
  %s2 = inlined_call_operand.vmem [shape: f32[32,1], index: 2, kind: input, shape index: {}]
  %s3 = inlined_call_operand.hbm [shape: f32[2,128,128], index: 3, kind: output, shape index: {}]
  %s4 = sld [smem:[#allocation0]]
  $region45: #{tpu_custom_call.1} parent=0
    _
  %s6 = ssub.s32 1, %s4
  %s7 = scalar_select 0, %s6, %s4
  $region1: #{tpu_custom_call.1} parent=0
    #allocation3 [shape = 'u8[131072]{0}', space=vmem, size = 0x20000, scoped, tag = 'output window, operand 0']
    #allocation4 [shape = 's32[2]{0}', space=sflag, size = 0x8, scoped, tag = 'scoped memory for tpu_custom_call.1']
    %8 = vsyncpa [#allocation4], 0
    %s9 = scalar_lea.sflag [#allocation4], 1
    %10 = vsyncpa %s9, 0
    loop: start=0, step=1, limit=4
    $region2: #{tpu_custom_call.1} parent=1 // loop_pre_header
      _
    $region3: #{tpu_custom_call.1} parent=1 // loop_header
      %s12 = sphi 0, %s16
      %p13 = scmp.ge.s32.totalorder %s12, 4
      %s19 = sphi 0, %s31
      %s20 = sphi 0, %s27
      %s21 = sphi 0, %s19
      %s22 = sphi 0, %s20
      %s23 = sphi 0, %s21
      %s24 = sphi 0, %s22
      %s36 = sphi 0, %s38
      %s39 = sphi 0, %s36
      %s40 = sphi 0, %s39
      %s56 = sphi 0, %s40
      %s62 = sphi 0, %s64
      %s65 = sphi 0, %s62
      %s66 = sphi 0, %s65
      %s82 = sphi 0, %s66
      %s86 = sphi 0, %s86
      %s88 = sphi 0, %s86
      %s89 = sphi 0, %s88
      %s103 = sphi 0, %s89
      %s111 = sphi 0, %s113
      %s114 = sphi 0, %s111
      %s115 = sphi 0, %s114
      %s131 = sphi 0, %s115
    $region4: #{tpu_custom_call.1} parent=1 // loop_header_branch
      %15 = sbr.rel (%p13) target = $region8
    $region5: #{tpu_custom_call.1} parent=1 // loop_body
      %s17 = ssub.s32 %s12, 1
      %s18 = ssub.s32 %s12, 2
      %s25 = sadd.s32 1, %s20
      %p26 = scmp.ge.s32.totalorder %s25, 1
      %s27 = scalar_select %p26, 0, %s25
      %s28 = sadd.s32 1, %s19
      %s29 = scalar_select %p26, %s28, %s19
      %p30 = scmp.ge.s32.totalorder %s29, 2
      %s31 = scalar_select %p30, 0, %s29
      %s32 = ssub.s32 %s19, %s31
      %s33 = ssub.s32 %s20, %s27
      %s34 = sor.u32 %s32, %s33
      %p35 = scmp.eq.s32.totalorder %s34, 0
      %s37 = sadd.s32 %s36, 1
      %s38 = scalar_select %p35, %s36, %s37
      %p41 = pneg %p35
      %p42 = scmp.eq.s32.totalorder %s12, 1
      %p43 = por %p41, %p42
      %p44 = scmp.ne.s32.totalorder %s36, %s39
      %p45 = scmp.eq.s32.totalorder %s12, 0
      %p46 = por %p44, %p45
      %p47 = scmp.ne.s32.totalorder %s36, %s39
      %p48 = scmp.eq.s32.totalorder %s17, 1
      %p49 = por %p47, %p48
      %p50 = scmp.ne.s32.totalorder %s39, %s40
      %p51 = scmp.eq.s32.totalorder %s17, 0
      %p52 = por %p50, %p51
      %p53 = scmp.ne.s32.totalorder %s39, %s40
      %p54 = scmp.eq.s32.totalorder %s18, 1
      %p55 = por %p53, %p54
      %p57 = scmp.ne.s32.totalorder %s40, %s56
      %p58 = scmp.eq.s32.totalorder %s18, 0
      %p59 = por %p57, %p58
      %s60 = ssub.s32 %s19, %s31
      %p61 = scmp.eq.s32.totalorder %s60, 0
      %s63 = sadd.s32 %s62, 1
      %s64 = scalar_select %p61, %s62, %s63
      %p67 = pneg %p61
      %p68 = scmp.eq.s32.totalorder %s12, 1
      %p69 = por %p67, %p68
      %p70 = scmp.ne.s32.totalorder %s62, %s65
      %p71 = scmp.eq.s32.totalorder %s12, 0
      %p72 = por %p70, %p71
      %p73 = scmp.ne.s32.totalorder %s62, %s65
      %p74 = scmp.eq.s32.totalorder %s17, 1
      %p75 = por %p73, %p74
      %p76 = scmp.ne.s32.totalorder %s65, %s66
      %p77 = scmp.eq.s32.totalorder %s17, 0
      %p78 = por %p76, %p77
      %p79 = scmp.ne.s32.totalorder %s65, %s66
      %p80 = scmp.eq.s32.totalorder %s18, 1
      %p81 = por %p79, %p80
      %p83 = scmp.ne.s32.totalorder %s66, %s82
      %p84 = scmp.eq.s32.totalorder %s18, 0
      %p85 = por %p83, %p84
      %s87 = sadd.s32 %s86, 1
      %p90 = scmp.eq.s32.totalorder %s12, 1
      %p91 = scmp.ne.s32.totalorder %s86, %s88
      %p92 = scmp.eq.s32.totalorder %s12, 0
      %p93 = por %p91, %p92
      %p94 = scmp.ne.s32.totalorder %s86, %s88
      %p95 = scmp.eq.s32.totalorder %s17, 1
      %p96 = por %p94, %p95
      %p97 = scmp.ne.s32.totalorder %s88, %s89
      %p98 = scmp.eq.s32.totalorder %s17, 0
      %p99 = por %p97, %p98
      %p100 = scmp.ne.s32.totalorder %s88, %s89
      %p101 = scmp.eq.s32.totalorder %s18, 1
      %p102 = por %p100, %p101
      %p104 = scmp.ne.s32.totalorder %s89, %s103
      %p105 = scmp.eq.s32.totalorder %s18, 0
      %p106 = por %p104, %p105
      %s107 = ssub.s32 %s19, %s31
      %s108 = ssub.s32 %s20, %s27
      %s109 = sor.u32 %s107, %s108
      %p110 = scmp.eq.s32.totalorder %s109, 0
      %s112 = sadd.s32 %s111, 1
      %s113 = scalar_select %p110, %s111, %s112
      %p116 = pneg %p110
      %p117 = scmp.eq.s32.totalorder %s12, 1
      %p118 = por %p116, %p117
      %p119 = scmp.ne.s32.totalorder %s111, %s114
      %p120 = scmp.eq.s32.totalorder %s12, 0
      %p121 = por %p119, %p120
      %p122 = scmp.ne.s32.totalorder %s111, %s114
      %p123 = scmp.eq.s32.totalorder %s17, 1
      %p124 = por %p122, %p123
      %p125 = scmp.ne.s32.totalorder %s114, %s115
      %p126 = scmp.eq.s32.totalorder %s17, 0
      %p127 = por %p125, %p126
      %p128 = scmp.ne.s32.totalorder %s114, %s115
      %p129 = scmp.eq.s32.totalorder %s18, 1
      %p130 = por %p128, %p129
      %p132 = scmp.ne.s32.totalorder %s115, %s131
      %p133 = scmp.eq.s32.totalorder %s18, 0
      %p134 = por %p132, %p133
      %p135 = scmp.le.s32.totalorder 1, %s12
      %p136 = scmp.lt.s32.totalorder %s12, 3
      %p137 = pnand %p135, %p136
      %p138 = pneg %p137
      // Predicated region
      $region9: #{tpu_custom_call.1} parent=5 // pred_check
        _
      $region10: #{tpu_custom_call.1} parent=5 // pred_check_branch
        %140 = sbr.rel (%p137) target = $region12
      $region11: #{tpu_custom_call.1} parent=5 // pred_region
        %s141 = ssub.s32 %s12, 1
        // Predicated region
        $region13: #{tpu_custom_call.1} parent=11 // pred_check
          %p142 = pneg %p99
        $region14: #{tpu_custom_call.1} parent=11 // pred_check_branch
          %144 = sbr.rel (%p142) target = $region16
        $region15: #{tpu_custom_call.1} parent=11 // pred_region
          _
        $region16: #{tpu_custom_call.1} parent=11 // pred_fallthru
          _
      $region12: #{tpu_custom_call.1} parent=5 // pred_fallthru
        _
      %p145 = scmp.lt.s32.totalorder %s12, 2
      // Predicated region
      $region17: #{tpu_custom_call.1} parent=5 // pred_check
        %p146 = pneg %p145
      $region18: #{tpu_custom_call.1} parent=5 // pred_check_branch
        %148 = sbr.rel (%p146) target = $region20
      $region19: #{tpu_custom_call.1} parent=5 // pred_region
        // Predicated region
        $region21: #{tpu_custom_call.1} parent=19 // pred_check
          %p149 = pneg %p46
        $region22: #{tpu_custom_call.1} parent=19 // pred_check_branch
          %151 = sbr.rel (%p149) target = $region24
        $region23: #{tpu_custom_call.1} parent=19 // pred_region
          %p152 = scmp.lt.s32.totalorder %s19, 1
          %s153 = scalar_select %p152, %s19, 1
          %p154 = scmp.lt.s32.totalorder %s20, 0
          %s155 = scalar_select %p154, %s20, 0
          %s156 = smul.addr %s153, 4
          %s157 = sadd.s32 %s155, %s156
          %s158 = smul.addr %s157, 4
          %s159 = scalar_lea.vmem %s0, %s158
        $region24: #{tpu_custom_call.1} parent=19 // pred_fallthru
          _
        // Predicated region
        $region25: #{tpu_custom_call.1} parent=19 // pred_check
          %p160 = pneg %p72
        $region26: #{tpu_custom_call.1} parent=19 // pred_check_branch
          %162 = sbr.rel (%p160) target = $region28
        $region27: #{tpu_custom_call.1} parent=19 // pred_region
          %p163 = scmp.lt.s32.totalorder %s19, 1
          %s164 = scalar_select %p163, %s19, 1
          %s165 = smul.addr %s164, 4
          %s166 = smul.addr %s165, 8
          %s167 = scalar_lea.vmem %s1, %s166
        $region28: #{tpu_custom_call.1} parent=19 // pred_fallthru
          _
      $region20: #{tpu_custom_call.1} parent=5 // pred_fallthru
        _
      %p168 = scmp.le.s32.totalorder 1, %s12
      %p169 = scmp.lt.s32.totalorder %s12, 3
      %p170 = pnand %p168, %p169
      %p171 = pneg %p170
      // Predicated region
      $region29: #{tpu_custom_call.1} parent=5 // pred_check
        _
      $region30: #{tpu_custom_call.1} parent=5 // pred_check_branch
        %173 = sbr.rel (%p170) target = $region32
      $region31: #{tpu_custom_call.1} parent=5 // pred_region
        %s174 = ssub.s32 %s12, 1
        %p175 = scmp.lt.s32.totalorder %s21, 1
        %s176 = scalar_select %p175, %s21, 1
        %p177 = scmp.lt.s32.totalorder %s22, 0
        %s178 = scalar_select %p177, %s22, 0
        %s179 = smul.addr %s176, 4
        %s180 = sadd.s32 %s178, %s179
        %s181 = smul.addr %s180, 4
        %s182 = scalar_lea.vmem %s0, %s181
        %p183 = pneg %p52
        %p184 = pneg %p49
        %p185 = scmp.lt.s32.totalorder %s21, 1
        %s186 = scalar_select %p185, %s21, 1
        %s187 = smul.addr %s186, 4
        %s188 = smul.addr %s187, 8
        %s189 = scalar_lea.vmem %s1, %s188
        %p190 = pneg %p78
        %p191 = pneg %p75
        %p192 = pneg %p99
        %p193 = pneg %p96
        %p194 = pneg %p127
        %p195 = pneg %p124
        %s196 = sand.u32 %s114, 1
        %s197 = scalar_lea.sflag [#allocation4], %s196
        %s198 = sand.u32 %s114, 1
        %s199 = smul.addr %s198, 128
        %s200 = scalar_lea.vmem [#allocation3], %s199
        %p201 = scmp.lt.s32.totalorder %s21, 1
        %s202 = scalar_select %p201, %s21, 1
        %p203 = scmp.lt.s32.totalorder %s22, 0
        %s204 = scalar_select %p203, %s22, 0
        %s205 = smul.addr %s202, 4
        %s206 = sadd.s32 %s204, %s205
        %s207 = smul.addr %s206, 4
        %s208 = scalar_lea.vmem %s0, %s207
        %p209 = scmp.lt.s32.totalorder %s21, 1
        %s210 = scalar_select %p209, %s21, 1
        %s211 = smul.addr %s210, 4
        %s212 = smul.addr %s211, 8
        %s213 = scalar_lea.vmem %s1, %s212
        %s214 = smul.u32 16, %s22
        %v215 = vld [vmem:[%s213] sm:$0xff]
        %v216 = vld [vmem:[%s213 + $0x8] sm:$0xff]
        %v217 = vld [vmem:[%s213 + $0x10] sm:$0xff]
        %v218 = vld [vmem:[%s213 + $0x18] sm:$0xff]
        %v219 = vld [vmem:[%s2] sm:$0xff]
        %v220 = vld [vmem:[%s2 + $0x8] sm:$0xff]
        %v221 = vld [vmem:[%s2 + $0x10] sm:$0xff]
        %v222 = vld [vmem:[%s2 + $0x18] sm:$0xff]
        %224 = vset.pattern.permute.xlu0 0
        %225 = vperm.xlu0 %224, %v219
        %v226 = vpop.permute.xlu0 %225
        %229 = vset.pattern.permute.xlu0 0
        %230 = vperm.xlu0 %229, %v220
        %v231 = vpop.permute.xlu0 %230
        %234 = vset.pattern.permute.xlu0 0
        %235 = vperm.xlu0 %234, %v221
        %v236 = vpop.permute.xlu0 %235
        %239 = vset.pattern.permute.xlu0 0
        %240 = vperm.xlu0 %239, %v222
        %v241 = vpop.permute.xlu0 %240
        %v243 = vld [vmem:[%s208] sm:$0x1]
        %s244 = scalar_lea.vmem %s208, 4
        %v245 = vld [vmem:[%s244] sm:$0x1]
        %s246 = scalar_lea.vmem %s208, 8
        %v247 = vld [vmem:[%s246] sm:$0x1]
        %v248 = vsub.f32 %v247, %v243
        %s249 = scalar_lea.vmem %s208, 12
        %v250 = vld [vmem:[%s249] sm:$0x1]
        %v251 = vsub.f32 %v250, %v245
        %v252 = vmax.f32 %v251, 1e-30
        %v253 = vrcp.pop %v252
        %v254 = vmul.f32 %v248, %v253
        %v255 = vmul.f32 %v248, %v251
        %257 = vset.pattern.permute.xlu0 0
        %258 = vperm.xlu0 %257, %v215
        %v259 = vpop.permute.xlu0 %258
        %262 = vset.pattern.permute.xlu0 0
        %263 = vperm.xlu0 %262, %v216
        %v264 = vpop.permute.xlu0 %263
        %267 = vset.pattern.permute.xlu0 0
        %268 = vperm.xlu0 %267, %v217
        %v269 = vpop.permute.xlu0 %268
        %272 = vset.pattern.permute.xlu0 0
        %273 = vperm.xlu0 %272, %v218
        %v274 = vpop.permute.xlu0 %273
        %v276 = vlaneseq
        %v277 = vshrl.u32 %v276, 7
        %v278 = vsub.s32 0, %v277
        %v279 = vrot.slane %v243, %v278
        %v280 = vmul.f32 %v259, %v279
        %v281 = vmul.f32 %v264, %v279
        %v282 = vmul.f32 %v269, %v279
        %v283 = vmul.f32 %v274, %v279
        %v284 = vadd.f32 %v226, %v280
        %v285 = vadd.f32 %v231, %v281
        %v286 = vadd.f32 %v236, %v282
        %v287 = vadd.f32 %v241, %v283
        %288 = vset.pattern.permute.xlu0 1
        %289 = vperm.xlu0 %288, %v215
        %v290 = vpop.permute.xlu0 %289
        %292 = vset.pattern.permute.xlu0 1
        %293 = vperm.xlu0 %292, %v216
        %v294 = vpop.permute.xlu0 %293
        %296 = vset.pattern.permute.xlu0 1
        %297 = vperm.xlu0 %296, %v217
        %v298 = vpop.permute.xlu0 %297
        %300 = vset.pattern.permute.xlu0 1
        %301 = vperm.xlu0 %300, %v218
        %v302 = vpop.permute.xlu0 %301
        %v304 = vlaneseq
        %v305 = vshrl.u32 %v304, 7
        %v306 = vsub.s32 0, %v305
        %v307 = vrot.slane %v245, %v306
        %v308 = vmul.f32 %v290, %v307
        %v309 = vmul.f32 %v294, %v307
        %v310 = vmul.f32 %v298, %v307
        %v311 = vmul.f32 %v302, %v307
        %v312 = vadd.f32 %v284, %v308
        %v313 = vadd.f32 %v285, %v309
        %v314 = vadd.f32 %v286, %v310
        %v315 = vadd.f32 %v287, %v311
        %316 = vset.pattern.permute.xlu0 2
        %317 = vperm.xlu0 %316, %v215
        %v318 = vpop.permute.xlu0 %317
        %320 = vset.pattern.permute.xlu0 2
        %321 = vperm.xlu0 %320, %v216
        %v322 = vpop.permute.xlu0 %321
        %324 = vset.pattern.permute.xlu0 2
        %325 = vperm.xlu0 %324, %v217
        %v326 = vpop.permute.xlu0 %325
        %328 = vset.pattern.permute.xlu0 2
        %329 = vperm.xlu0 %328, %v218
        %v330 = vpop.permute.xlu0 %329
        %v332 = vlaneseq
        %v333 = vshrl.u32 %v332, 7
        %v334 = vsub.s32 0, %v333
        %v335 = vrot.slane %v248, %v334
        %v336 = vmul.f32 %v318, %v335
        %v337 = vmul.f32 %v322, %v335
        %v338 = vmul.f32 %v326, %v335
        %v339 = vmul.f32 %v330, %v335
        %v340 = vadd.f32 %v312, %v336
        %v341 = vadd.f32 %v313, %v337
        %v342 = vadd.f32 %v314, %v338
        %v343 = vadd.f32 %v315, %v339
        %344 = vset.pattern.permute.xlu0 3
        %345 = vperm.xlu0 %344, %v215
        %v346 = vpop.permute.xlu0 %345
        %348 = vset.pattern.permute.xlu0 3
        %349 = vperm.xlu0 %348, %v216
        %v350 = vpop.permute.xlu0 %349
        %352 = vset.pattern.permute.xlu0 3
        %353 = vperm.xlu0 %352, %v217
        %v354 = vpop.permute.xlu0 %353
        %356 = vset.pattern.permute.xlu0 3
        %357 = vperm.xlu0 %356, %v218
        %v358 = vpop.permute.xlu0 %357
        %v360 = vlaneseq
        %v361 = vshrl.u32 %v360, 7
        %v362 = vsub.s32 0, %v361
        %v363 = vrot.slane %v251, %v362
        %v364 = vmul.f32 %v346, %v363
        %v365 = vmul.f32 %v350, %v363
        %v366 = vmul.f32 %v354, %v363
        %v367 = vmul.f32 %v358, %v363
        %v368 = vadd.f32 %v340, %v364
        %v369 = vadd.f32 %v341, %v365
        %v370 = vadd.f32 %v342, %v366
        %v371 = vadd.f32 %v343, %v367
        %372 = vset.pattern.permute.xlu0 4
        %373 = vperm.xlu0 %372, %v215
        %v374 = vpop.permute.xlu0 %373
        %376 = vset.pattern.permute.xlu0 4
        %377 = vperm.xlu0 %376, %v216
        %v378 = vpop.permute.xlu0 %377
        %380 = vset.pattern.permute.xlu0 4
        %381 = vperm.xlu0 %380, %v217
        %v382 = vpop.permute.xlu0 %381
        %384 = vset.pattern.permute.xlu0 4
        %385 = vperm.xlu0 %384, %v218
        %v386 = vpop.permute.xlu0 %385
        %v388 = vlaneseq
        %v389 = vshrl.u32 %v388, 7
        %v390 = vsub.s32 0, %v389
        %v391 = vrot.slane %v254, %v390
        %v392 = vmul.f32 %v374, %v391
        %v393 = vmul.f32 %v378, %v391
        %v394 = vmul.f32 %v382, %v391
        %v395 = vmul.f32 %v386, %v391
        %v396 = vadd.f32 %v368, %v392
        %v397 = vadd.f32 %v369, %v393
        %v398 = vadd.f32 %v370, %v394
        %v399 = vadd.f32 %v371, %v395
        %400 = vset.pattern.permute.xlu0 5
        %401 = vperm.xlu0 %400, %v215
        %v402 = vpop.permute.xlu0 %401
        %404 = vset.pattern.permute.xlu0 5
        %405 = vperm.xlu0 %404, %v216
        %v406 = vpop.permute.xlu0 %405
        %408 = vset.pattern.permute.xlu0 5
        %409 = vperm.xlu0 %408, %v217
        %v410 = vpop.permute.xlu0 %409
        %412 = vset.pattern.permute.xlu0 5
        %413 = vperm.xlu0 %412, %v218
        %v414 = vpop.permute.xlu0 %413
        %v416 = vlaneseq
        %v417 = vshrl.u32 %v416, 7
        %v418 = vsub.s32 0, %v417
        %v419 = vrot.slane %v255, %v418
        %v420 = vmul.f32 %v402, %v419
        %v421 = vmul.f32 %v406, %v419
        %v422 = vmul.f32 %v410, %v419
        %v423 = vmul.f32 %v414, %v419
        %v424 = vadd.f32 %v396, %v420
        %v425 = vadd.f32 %v397, %v421
        %v426 = vadd.f32 %v398, %v422
        %v427 = vadd.f32 %v399, %v423
        %v428 = vxor.u32 %v424, 2147483648
        %v429 = vxor.u32 %v425, 2147483648
        %v430 = vxor.u32 %v426, 2147483648
        %v431 = vxor.u32 %v427, 2147483648
        %v432 = vmul.f32 %v428, 1.442695
        %v433 = vpow.pop %v432
        %v434 = vmul.f32 %v429, 1.442695
        %v435 = vpow.pop %v434
        %v436 = vmul.f32 %v430, 1.442695
        %v437 = vpow.pop %v436
        %v438 = vmul.f32 %v431, 1.442695
        %v439 = vpow.pop %v438
        %v440 = vadd.f32 %v433, 1.0
        %v441 = vadd.f32 %v435, 1.0
        %v442 = vadd.f32 %v437, 1.0
        %v443 = vadd.f32 %v439, 1.0
        %v444 = vrcp.pop %v440
        %v445 = vmul.f32 1.0, %v444
        %v446 = vrcp.pop %v441
        %v447 = vmul.f32 1.0, %v446
        %v448 = vrcp.pop %v442
        %v449 = vmul.f32 1.0, %v448
        %v450 = vrcp.pop %v443
        %v451 = vmul.f32 1.0, %v450
        %452 = vst [vmem:[#allocation2] sm:$0xff] %v445
        %453 = vst [vmem:[#allocation2 + $0x8] sm:$0xff] %v447
        %454 = vst [vmem:[#allocation2 + $0x10] sm:$0xff] %v449
        %455 = vst [vmem:[#allocation2 + $0x18] sm:$0xff] %v451
        %v456 = vld [vmem:[%s208 + $0x1] sm:$0x1]
        %v457 = vld [vmem:[%s244 + $0x1] sm:$0x1]
        %v458 = vld [vmem:[%s246 + $0x1] sm:$0x1]
        %v459 = vsub.f32 %v458, %v456
        %v460 = vld [vmem:[%s249 + $0x1] sm:$0x1]
        %v461 = vsub.f32 %v460, %v457
        %v462 = vmax.f32 %v461, 1e-30
        %v463 = vrcp.pop %v462
        %v464 = vmul.f32 %v459, %v463
        %v465 = vmul.f32 %v459, %v461
        %v466 = vlaneseq
        %v467 = vshrl.u32 %v466, 7
        %v468 = vsub.s32 0, %v467
        %v469 = vrot.slane %v456, %v468
        %v470 = vmul.f32 %v259, %v469
        %v471 = vmul.f32 %v264, %v469
        %v472 = vmul.f32 %v269, %v469
        %v473 = vmul.f32 %v274, %v469
        %v474 = vadd.f32 %v226, %v470
        %v475 = vadd.f32 %v231, %v471
        %v476 = vadd.f32 %v236, %v472
        %v477 = vadd.f32 %v241, %v473
        %v478 = vlaneseq
        %v479 = vshrl.u32 %v478, 7
        %v480 = vsub.s32 0, %v479
        %v481 = vrot.slane %v457, %v480
        %v482 = vmul.f32 %v290, %v481
        %v483 = vmul.f32 %v294, %v481
        %v484 = vmul.f32 %v298, %v481
        %v485 = vmul.f32 %v302, %v481
        %v486 = vadd.f32 %v474, %v482
        %v487 = vadd.f32 %v475, %v483
        %v488 = vadd.f32 %v476, %v484
        %v489 = vadd.f32 %v477, %v485
        %v490 = vlaneseq
        %v491 = vshrl.u32 %v490, 7
        %v492 = vsub.s32 0, %v491
        %v493 = vrot.slane %v459, %v492
        %v494 = vmul.f32 %v318, %v493
        %v495 = vmul.f32 %v322, %v493
        %v496 = vmul.f32 %v326, %v493
        %v497 = vmul.f32 %v330, %v493
        %v498 = vadd.f32 %v486, %v494
        %v499 = vadd.f32 %v487, %v495
        %v500 = vadd.f32 %v488, %v496
        %v501 = vadd.f32 %v489, %v497
        %v502 = vlaneseq
        %v503 = vshrl.u32 %v502, 7
        %v504 = vsub.s32 0, %v503
        %v505 = vrot.slane %v461, %v504
        %v506 = vmul.f32 %v346, %v505
        %v507 = vmul.f32 %v350, %v505
        %v508 = vmul.f32 %v354, %v505
        %v509 = vmul.f32 %v358, %v505
        %v510 = vadd.f32 %v498, %v506
        %v511 = vadd.f32 %v499, %v507
        %v512 = vadd.f32 %v500, %v508
        %v513 = vadd.f32 %v501, %v509
        %v514 = vlaneseq
        %v515 = vshrl.u32 %v514, 7
        %v516 = vsub.s32 0, %v515
        %v517 = vrot.slane %v464, %v516
        %v518 = vmul.f32 %v374, %v517
        %v519 = vmul.f32 %v378, %v517
        %v520 = vmul.f32 %v382, %v517
        %v521 = vmul.f32 %v386, %v517
        %v522 = vadd.f32 %v510, %v518
        %v523 = vadd.f32 %v511, %v519
        %v524 = vadd.f32 %v512, %v520
        %v525 = vadd.f32 %v513, %v521
        %v526 = vlaneseq
        %v527 = vshrl.u32 %v526, 7
        %v528 = vsub.s32 0, %v527
        %v529 = vrot.slane %v465, %v528
        %v530 = vmul.f32 %v402, %v529
        %v531 = vmul.f32 %v406, %v529
        %v532 = vmul.f32 %v410, %v529
        %v533 = vmul.f32 %v414, %v529
        %v534 = vadd.f32 %v522, %v530
        %v535 = vadd.f32 %v523, %v531
        %v536 = vadd.f32 %v524, %v532
        %v537 = vadd.f32 %v525, %v533
        %v538 = vxor.u32 %v534, 2147483648
        %v539 = vxor.u32 %v535, 2147483648
        %v540 = vxor.u32 %v536, 2147483648
        %v541 = vxor.u32 %v537, 2147483648
        %v542 = vmul.f32 %v538, 1.442695
        %v543 = vpow.pop %v542
        %v544 = vmul.f32 %v539, 1.442695
        %v545 = vpow.pop %v544
        %v546 = vmul.f32 %v540, 1.442695
        %v547 = vpow.pop %v546
        %v548 = vmul.f32 %v541, 1.442695
        %v549 = vpow.pop %v548
        %v550 = vadd.f32 %v543, 1.0
        %v551 = vadd.f32 %v545, 1.0
        %v552 = vadd.f32 %v547, 1.0
        %v553 = vadd.f32 %v549, 1.0
        %v554 = vrcp.pop %v550
        %v555 = vmul.f32 1.0, %v554
        %v556 = vrcp.pop %v551
        %v557 = vmul.f32 1.0, %v556
        %v558 = vrcp.pop %v552
        %v559 = vmul.f32 1.0, %v558
        %v560 = vrcp.pop %v553
        %v561 = vmul.f32 1.0, %v560
        %562 = vst [vmem:[#allocation2 + $0x20] sm:$0xff] %v555
        %563 = vst [vmem:[#allocation2 + $0x28] sm:$0xff] %v557
        %564 = vst [vmem:[#allocation2 + $0x30] sm:$0xff] %v559
        %565 = vst [vmem:[#allocation2 + $0x38] sm:$0xff] %v561
        %v566 = vld [vmem:[%s208 + $0x2] sm:$0x1]
        %v567 = vld [vmem:[%s244 + $0x2] sm:$0x1]
        %v568 = vld [vmem:[%s246 + $0x2] sm:$0x1]
        %v569 = vsub.f32 %v568, %v566
        %v570 = vld [vmem:[%s249 + $0x2] sm:$0x1]
        %v571 = vsub.f32 %v570, %v567
        %v572 = vmax.f32 %v571, 1e-30
        %v573 = vrcp.pop %v572
        %v574 = vmul.f32 %v569, %v573
        %v575 = vmul.f32 %v569, %v571
        %v576 = vlaneseq
        %v577 = vshrl.u32 %v576, 7
        %v578 = vsub.s32 0, %v577
        %v579 = vrot.slane %v566, %v578
        %v580 = vmul.f32 %v259, %v579
        %v581 = vmul.f32 %v264, %v579
        %v582 = vmul.f32 %v269, %v579
        %v583 = vmul.f32 %v274, %v579
        %v584 = vadd.f32 %v226, %v580
        %v585 = vadd.f32 %v231, %v581
        %v586 = vadd.f32 %v236, %v582
        %v587 = vadd.f32 %v241, %v583
        %v588 = vlaneseq
        %v589 = vshrl.u32 %v588, 7
        %v590 = vsub.s32 0, %v589
        %v591 = vrot.slane %v567, %v590
        %v592 = vmul.f32 %v290, %v591
        %v593 = vmul.f32 %v294, %v591
        %v594 = vmul.f32 %v298, %v591
        %v595 = vmul.f32 %v302, %v591
        %v596 = vadd.f32 %v584, %v592
        %v597 = vadd.f32 %v585, %v593
        %v598 = vadd.f32 %v586, %v594
        %v599 = vadd.f32 %v587, %v595
        %v600 = vlaneseq
        %v601 = vshrl.u32 %v600, 7
        %v602 = vsub.s32 0, %v601
        %v603 = vrot.slane %v569, %v602
        %v604 = vmul.f32 %v318, %v603
        %v605 = vmul.f32 %v322, %v603
        %v606 = vmul.f32 %v326, %v603
        %v607 = vmul.f32 %v330, %v603
        %v608 = vadd.f32 %v596, %v604
        %v609 = vadd.f32 %v597, %v605
        %v610 = vadd.f32 %v598, %v606
        %v611 = vadd.f32 %v599, %v607
        %v612 = vlaneseq
        %v613 = vshrl.u32 %v612, 7
        %v614 = vsub.s32 0, %v613
        %v615 = vrot.slane %v571, %v614
        %v616 = vmul.f32 %v346, %v615
        %v617 = vmul.f32 %v350, %v615
        %v618 = vmul.f32 %v354, %v615
        %v619 = vmul.f32 %v358, %v615
        %v620 = vadd.f32 %v608, %v616
        %v621 = vadd.f32 %v609, %v617
        %v622 = vadd.f32 %v610, %v618
        %v623 = vadd.f32 %v611, %v619
        %v624 = vlaneseq
        %v625 = vshrl.u32 %v624, 7
        %v626 = vsub.s32 0, %v625
        %v627 = vrot.slane %v574, %v626
        %v628 = vmul.f32 %v374, %v627
        %v629 = vmul.f32 %v378, %v627
        %v630 = vmul.f32 %v382, %v627
        %v631 = vmul.f32 %v386, %v627
        %v632 = vadd.f32 %v620, %v628
        %v633 = vadd.f32 %v621, %v629
        %v634 = vadd.f32 %v622, %v630
        %v635 = vadd.f32 %v623, %v631
        %v636 = vlaneseq
        %v637 = vshrl.u32 %v636, 7
        %v638 = vsub.s32 0, %v637
        %v639 = vrot.slane %v575, %v638
        %v640 = vmul.f32 %v402, %v639
        %v641 = vmul.f32 %v406, %v639
        %v642 = vmul.f32 %v410, %v639
        %v643 = vmul.f32 %v414, %v639
        %v644 = vadd.f32 %v632, %v640
        %v645 = vadd.f32 %v633, %v641
        %v646 = vadd.f32 %v634, %v642
        %v647 = vadd.f32 %v635, %v643
        %v648 = vxor.u32 %v644, 2147483648
        %v649 = vxor.u32 %v645, 2147483648
        %v650 = vxor.u32 %v646, 2147483648
        %v651 = vxor.u32 %v647, 2147483648
        %v652 = vmul.f32 %v648, 1.442695
        %v653 = vpow.pop %v652
        %v654 = vmul.f32 %v649, 1.442695
        %v655 = vpow.pop %v654
        %v656 = vmul.f32 %v650, 1.442695
        %v657 = vpow.pop %v656
        %v658 = vmul.f32 %v651, 1.442695
        %v659 = vpow.pop %v658
        %v660 = vadd.f32 %v653, 1.0
        %v661 = vadd.f32 %v655, 1.0
        %v662 = vadd.f32 %v657, 1.0
        %v663 = vadd.f32 %v659, 1.0
        %v664 = vrcp.pop %v660
        %v665 = vmul.f32 1.0, %v664
        %v666 = vrcp.pop %v661
        %v667 = vmul.f32 1.0, %v666
        %v668 = vrcp.pop %v662
        %v669 = vmul.f32 1.0, %v668
        %v670 = vrcp.pop %v663
        %v671 = vmul.f32 1.0, %v670
        %672 = vst [vmem:[#allocation2 + $0x40] sm:$0xff] %v665
        %673 = vst [vmem:[#allocation2 + $0x48] sm:$0xff] %v667
        %674 = vst [vmem:[#allocation2 + $0x50] sm:$0xff] %v669
        %675 = vst [vmem:[#allocation2 + $0x58] sm:$0xff] %v671
        %v676 = vld [vmem:[%s208 + $0x3] sm:$0x1]
        %v677 = vld [vmem:[%s244 + $0x3] sm:$0x1]
        %v678 = vld [vmem:[%s246 + $0x3] sm:$0x1]
        %v679 = vsub.f32 %v678, %v676
        %v680 = vld [vmem:[%s249 + $0x3] sm:$0x1]
        %v681 = vsub.f32 %v680, %v677
        %v682 = vmax.f32 %v681, 1e-30
        %v683 = vrcp.pop %v682
        %v684 = vmul.f32 %v679, %v683
        %v685 = vmul.f32 %v679, %v681
        %v686 = vlaneseq
        %v687 = vshrl.u32 %v686, 7
        %v688 = vsub.s32 0, %v687
        %v689 = vrot.slane %v676, %v688
        %v690 = vmul.f32 %v259, %v689
        %v691 = vmul.f32 %v264, %v689
        %v692 = vmul.f32 %v269, %v689
        %v693 = vmul.f32 %v274, %v689
        %v694 = vadd.f32 %v226, %v690
        %v695 = vadd.f32 %v231, %v691
        %v696 = vadd.f32 %v236, %v692
        %v697 = vadd.f32 %v241, %v693
        %v698 = vlaneseq
        %v699 = vshrl.u32 %v698, 7
        %v700 = vsub.s32 0, %v699
        %v701 = vrot.slane %v677, %v700
        %v702 = vmul.f32 %v290, %v701
        %v703 = vmul.f32 %v294, %v701
        %v704 = vmul.f32 %v298, %v701
        %v705 = vmul.f32 %v302, %v701
        %v706 = vadd.f32 %v694, %v702
        %v707 = vadd.f32 %v695, %v703
        %v708 = vadd.f32 %v696, %v704
        %v709 = vadd.f32 %v697, %v705
        %v710 = vlaneseq
        %v711 = vshrl.u32 %v710, 7
        %v712 = vsub.s32 0, %v711
        %v713 = vrot.slane %v679, %v712
        %v714 = vmul.f32 %v318, %v713
        %v715 = vmul.f32 %v322, %v713
        %v716 = vmul.f32 %v326, %v713
        %v717 = vmul.f32 %v330, %v713
        %v718 = vadd.f32 %v706, %v714
        %v719 = vadd.f32 %v707, %v715
        %v720 = vadd.f32 %v708, %v716
        %v721 = vadd.f32 %v709, %v717
        %v722 = vlaneseq
        %v723 = vshrl.u32 %v722, 7
        %v724 = vsub.s32 0, %v723
        %v725 = vrot.slane %v681, %v724
        %v726 = vmul.f32 %v346, %v725
        %v727 = vmul.f32 %v350, %v725
        %v728 = vmul.f32 %v354, %v725
        %v729 = vmul.f32 %v358, %v725
        %v730 = vadd.f32 %v718, %v726
        %v731 = vadd.f32 %v719, %v727
        %v732 = vadd.f32 %v720, %v728
        %v733 = vadd.f32 %v721, %v729
        %v734 = vlaneseq
        %v735 = vshrl.u32 %v734, 7
        %v736 = vsub.s32 0, %v735
        %v737 = vrot.slane %v684, %v736
        %v738 = vmul.f32 %v374, %v737
        %v739 = vmul.f32 %v378, %v737
        %v740 = vmul.f32 %v382, %v737
        %v741 = vmul.f32 %v386, %v737
        %v742 = vadd.f32 %v730, %v738
        %v743 = vadd.f32 %v731, %v739
        %v744 = vadd.f32 %v732, %v740
        %v745 = vadd.f32 %v733, %v741
        %v746 = vlaneseq
        %v747 = vshrl.u32 %v746, 7
        %v748 = vsub.s32 0, %v747
        %v749 = vrot.slane %v685, %v748
        %v750 = vmul.f32 %v402, %v749
        %v751 = vmul.f32 %v406, %v749
        %v752 = vmul.f32 %v410, %v749
        %v753 = vmul.f32 %v414, %v749
        %v754 = vadd.f32 %v742, %v750
        %v755 = vadd.f32 %v743, %v751
        %v756 = vadd.f32 %v744, %v752
        %v757 = vadd.f32 %v745, %v753
        %v758 = vxor.u32 %v754, 2147483648
        %v759 = vxor.u32 %v755, 2147483648
        %v760 = vxor.u32 %v756, 2147483648
        %v761 = vxor.u32 %v757, 2147483648
        %v762 = vmul.f32 %v758, 1.442695
        %v763 = vpow.pop %v762
        %v764 = vmul.f32 %v759, 1.442695
        %v765 = vpow.pop %v764
        %v766 = vmul.f32 %v760, 1.442695
        %v767 = vpow.pop %v766
        %v768 = vmul.f32 %v761, 1.442695
        %v769 = vpow.pop %v768
        %v770 = vadd.f32 %v763, 1.0
        %v771 = vadd.f32 %v765, 1.0
        %v772 = vadd.f32 %v767, 1.0
        %v773 = vadd.f32 %v769, 1.0
        %v774 = vrcp.pop %v770
        %v775 = vmul.f32 1.0, %v774
        %v776 = vrcp.pop %v771
        %v777 = vmul.f32 1.0, %v776
        %v778 = vrcp.pop %v772
        %v779 = vmul.f32 1.0, %v778
        %v780 = vrcp.pop %v773
        %v781 = vmul.f32 1.0, %v780
        %782 = vst [vmem:[#allocation2 + $0x60] sm:$0xff] %v775
        %783 = vst [vmem:[#allocation2 + $0x68] sm:$0xff] %v777
        %784 = vst [vmem:[#allocation2 + $0x70] sm:$0xff] %v779
        %785 = vst [vmem:[#allocation2 + $0x78] sm:$0xff] %v781
        %v786 = vld [vmem:[#allocation2] sm:$0xff]
        %v787 = vld [vmem:[#allocation2 + $0x8] sm:$0xff]
        %v788 = vld [vmem:[#allocation2 + $0x10] sm:$0xff]
        %v789 = vld [vmem:[#allocation2 + $0x18] sm:$0xff]
        %v790 = vld [vmem:[#allocation2 + $0x20] sm:$0xff]
        %v791 = vld [vmem:[#allocation2 + $0x28] sm:$0xff]
        %v792 = vld [vmem:[#allocation2 + $0x30] sm:$0xff]
        %v793 = vld [vmem:[#allocation2 + $0x38] sm:$0xff]
        %v794 = vld [vmem:[#allocation2 + $0x40] sm:$0xff]
        %v795 = vld [vmem:[#allocation2 + $0x48] sm:$0xff]
        %v796 = vld [vmem:[#allocation2 + $0x50] sm:$0xff]
        %v797 = vld [vmem:[#allocation2 + $0x58] sm:$0xff]
        %v798 = vld [vmem:[#allocation2 + $0x60] sm:$0xff]
        %v799 = vld [vmem:[#allocation2 + $0x68] sm:$0xff]
        %v800 = vld [vmem:[#allocation2 + $0x70] sm:$0xff]
        %v801 = vld [vmem:[#allocation2 + $0x78] sm:$0xff]
        %802 = vxpose.xlu0.b32.start [1/16] %v786, 128
        %803 = vxpose.xlu0.b32.cont [2/16] %v787, 128
        %804 = vxpose.xlu0.b32.cont [3/16] %v788, 128
        %805 = vxpose.xlu0.b32.cont [4/16] %v789, 128
        %806 = vxpose.xlu0.b32.cont [5/16] %v790, 128
        %807 = vxpose.xlu0.b32.cont [6/16] %v791, 128
        %808 = vxpose.xlu0.b32.cont [7/16] %v792, 128
        %809 = vxpose.xlu0.b32.cont [8/16] %v793, 128
        %810 = vxpose.xlu0.b32.cont [9/16] %v794, 128
        %811 = vxpose.xlu0.b32.cont [10/16] %v795, 128
        %812 = vxpose.xlu0.b32.cont [11/16] %v796, 128
        %813 = vxpose.xlu0.b32.cont [12/16] %v797, 128
        %814 = vxpose.xlu0.b32.cont [13/16] %v798, 128
        %815 = vxpose.xlu0.b32.cont [14/16] %v799, 128
        %816 = vxpose.xlu0.b32.cont [15/16] %v800, 128
        %817 = vxpose.xlu0.b32.end [16/16] %v801, 128
        %v818 = vpop.trf.xlu0
        %v819 = vpop.trf.xlu0
        %v820 = vpop.trf.xlu0
        %v821 = vpop.trf.xlu0
        %v822 = vpop.trf.xlu0
        %v823 = vpop.trf.xlu0
        %v824 = vpop.trf.xlu0
        %v825 = vpop.trf.xlu0
        %v826 = vpop.trf.xlu0
        %v827 = vpop.trf.xlu0
        %v828 = vpop.trf.xlu0
        %v829 = vpop.trf.xlu0
        %v830 = vpop.trf.xlu0
        %v831 = vpop.trf.xlu0
        %v832 = vpop.trf.xlu0
        %v833 = vpop.trf.xlu0
        %834 = vst [vmem:[%s200] sm:$0xff] %v818
        %835 = vst [vmem:[%s200 + $0x8] sm:$0xff] %v819
        %836 = vst [vmem:[%s200 + $0x10] sm:$0xff] %v820
        %837 = vst [vmem:[%s200 + $0x18] sm:$0xff] %v821
        %838 = vst [vmem:[%s200 + $0x20] sm:$0xff] %v822
        %839 = vst [vmem:[%s200 + $0x28] sm:$0xff] %v823
        %840 = vst [vmem:[%s200 + $0x30] sm:$0xff] %v824
        %841 = vst [vmem:[%s200 + $0x38] sm:$0xff] %v825
        %842 = vst [vmem:[%s200 + $0x40] sm:$0xff] %v826
        %843 = vst [vmem:[%s200 + $0x48] sm:$0xff] %v827
        %844 = vst [vmem:[%s200 + $0x50] sm:$0xff] %v828
        %845 = vst [vmem:[%s200 + $0x58] sm:$0xff] %v829
        %846 = vst [vmem:[%s200 + $0x60] sm:$0xff] %v830
        %847 = vst [vmem:[%s200 + $0x68] sm:$0xff] %v831
        %848 = vst [vmem:[%s200 + $0x70] sm:$0xff] %v832
        %849 = vst [vmem:[%s200 + $0x78] sm:$0xff] %v833
        %s850 = sand.u32 %s114, 1
        %s851 = scalar_lea.sflag [#allocation4], %s850
        %s852 = sand.u32 %s114, 1
        %s853 = smul.addr %s852, 128
        %s854 = scalar_lea.vmem [#allocation3], %s853
        // Predicated region
        $region33: #{tpu_custom_call.1} parent=31 // pred_check
          %p855 = pneg %p124
        $region34: #{tpu_custom_call.1} parent=31 // pred_check_branch
          %857 = sbr.rel (%p855) target = $region36
        $region35: #{tpu_custom_call.1} parent=31 // pred_region
          %s858 = smul.u32 16, %s22
          %s860 = ssub.s32 2048, 2048
          %861 = vsyncadd %s851, %s860
          %s862 = smul.addr %s21, 16
          %s863 = sadd.s32 %s858, %s862
          %s864 = smul.addr %s863, 128
          %s865 = scalar_lea.hbm %s3, %s864
          %s866 = sshll.u32 %s854, 4
          %s867 = int_to_ptr.vmem [resolvable:$true] %s866
          %872 = dma.vmem_to_hbm [thread:$0]  %s867, 2048, %s865, %s851, 128, 128, 8
        $region36: #{tpu_custom_call.1} parent=31 // pred_fallthru
          _
      $region32: #{tpu_custom_call.1} parent=5 // pred_fallthru
        _
      %p873 = scmp.le.s32.totalorder 2, %s12
      // Predicated region
      $region37: #{tpu_custom_call.1} parent=5 // pred_check
        %p874 = pneg %p873
      $region38: #{tpu_custom_call.1} parent=5 // pred_check_branch
        %876 = sbr.rel (%p874) target = $region40
      $region39: #{tpu_custom_call.1} parent=5 // pred_region
        %s877 = ssub.s32 %s12, 2
        // Predicated region
        $region41: #{tpu_custom_call.1} parent=39 // pred_check
          %p878 = pneg %p130
        $region42: #{tpu_custom_call.1} parent=39 // pred_check_branch
          %880 = sbr.rel (%p878) target = $region44
        $region43: #{tpu_custom_call.1} parent=39 // pred_region
          %s881 = sand.u32 %s115, 1
          %s882 = scalar_lea.sflag [#allocation4], %s881
          %s883 = sand.u32 %s115, 1
          %s884 = smul.addr %s883, 128
          %s885 = scalar_lea.vmem [#allocation3], %s884
          %886 = dma.done %s882, 2048
        $region44: #{tpu_custom_call.1} parent=39 // pred_fallthru
          _
      $region40: #{tpu_custom_call.1} parent=5 // pred_fallthru
        _
    $region6: #{tpu_custom_call.1} parent=1 // loop_footer
      %s16 = sadd.s32 1, %s12
    $region7: #{tpu_custom_call.1} parent=1 // loop_footer_branch
      %11 = sbr.rel target = $region3
    $region8: #{tpu_custom_call.1} parent=1 // loop_exit
      _
    %887 = vsyncpa [#allocation4], 1
    %s888 = scalar_lea.sflag [#allocation4], 1
    %889 = vsyncpa %s888, 1

</llo_original>
